<compile_context>
chip_gen: v7x
topology: tpu7x:2x2x1
jax: 0.10.0
libtpu: 0.0.40
codegen_flags: <defaults>
</compile_context>

<pallas_src>
import jax
import jax.numpy as jnp
from jax.experimental import pallas as pl
from jax.experimental.pallas import tpu as pltpu


def _round_up(n: int, m: int) -> int:
    return ((n + m - 1) // m) * m


def _block_diag(w, p):
    """(kin, kout) -> (p*kin, p*kout) block-diagonal matrix with p copies of w."""
    if p == 1:
        return w
    kin, kout = w.shape
    eye = jnp.eye(p, dtype=w.dtype)
    return (eye[:, None, :, None] * w[None, :, None, :]).reshape(p * kin, p * kout)


def mlp_kernel(x_ref, w1_ref, b1_ref, w2_ref, b2_ref, w3_ref, b3_ref, out_ref):
    """One (TR, P*63) packed batch tile -> one (TR, P*3) packed logits tile.

    The whole 63->16->8->3 MLP (3 matmuls + biases + 2 ReLUs) is fused, operating
    on block-diagonal weights so each MXU LHS row carries P logical samples.
    No explicit upcast of the input tile: the MXU accumulates in f32 via
    preferred_element_type.
    """
    x = x_ref[...]                                                        # (TR, P*63)

    h1 = jnp.dot(x, w1_ref[...], preferred_element_type=jnp.float32) + b1_ref[...]
    h1 = jnp.maximum(h1, 0.0)                                             # (TR, P*16)

    h2 = jnp.dot(h1, w2_ref[...], preferred_element_type=jnp.float32) + b2_ref[...]
    h2 = jnp.maximum(h2, 0.0)                                             # (TR, P*8)

    out = jnp.dot(h2, w3_ref[...], preferred_element_type=jnp.float32) + b3_ref[...]
    out_ref[...] = out.astype(out_ref.dtype)                              # (TR, P*3)


def neural_network_forward(x, params, *, tb=4096, pack=4):
    """Forward pass of the 63 -> 16 -> 8 -> 3 ReLU MLP (PyTorch NeuralNetwork).

    x:    (B, 63) or (B, 21, 3) etc. -- flattened like nn.Flatten.
    tb:   logical batch rows per grid step. Default 4096 (=> 1024 packed rows at
          pack=4, ~1 MiB per double-buffered input block) amortizes per-step
          overhead on all generations. Only if you push tb past ~32K logical rows
          on v5e/v7x would pltpu.CompilerParams(vmem_limit_bytes=...) be needed.
    pack: row-packing factor P (block-diagonal trick). 4 for v6e/v7x (contraction
          K = 4*63 = 252 <= 256), 2 recommended on v5e (128-wide MXU). Falls back
          to 2 / 1 automatically when P does not divide B.
    """
    B = x.shape[0]
    x = x.reshape(B, -1)                                   # nn.Flatten (free, row-major)
    assert x.shape[1] == 63, f"expected 63 features, got {x.shape[1]}"

    # --- pick the packing factor P (must divide B so the reshape is free) ---
    if pack >= 4 and B % 4 == 0:
        P = 4
    elif pack >= 2 and B % 2 == 0:
        P = 2
    else:
        P = 1

    R, K = B // P, P * 63
    x_p = x.reshape(R, K)                                  # free contiguous regrouping

    # --- block-diagonal packed weights (tiny: <= ~130 KB total; in production
    #     these would be built once and cached, not per call) ---
    w1 = _block_diag(params["w1"], P)
    w2 = _block_diag(params["w2"], P)
    w3 = _block_diag(params["w3"], P)
    b1 = jnp.tile(params["b1"], (1, P))
    b2 = jnp.tile(params["b2"], (1, P))
    b3 = jnp.tile(params["b3"], (1, P))

    # --- batch tile in packed rows ---
    if R <= 8:
        TR = R                                             # single full-extent block
    else:
        TR = _round_up(max(tb // P, 8), 8)
        # Keep >= 4 grid steps when possible so ("parallel",) gives both v7x
        # TensorCores >= 2 steps each; harmless on single-TC v5e/v6e.
        TR = min(TR, max(8, _round_up(pl.cdiv(R, 4), 8)))
    grid = (pl.cdiv(R, TR),)                               # ragged last block is fine:
                                                           # rows are independent and
                                                           # OOB output rows are masked.

    # Weights/biases: full-extent block, constant index_map -> VMEM-resident.
    resident = lambda a: pl.BlockSpec(a.shape, lambda i: (0,) * a.ndim)

    out_p = pl.pallas_call(
        mlp_kernel,
        out_shape=jax.ShapeDtypeStruct((R, 3 * P), jnp.float32),
        grid=grid,
        in_specs=[
            pl.BlockSpec((TR, K), lambda i: (i, 0)),       # streamed packed-x tiles
            resident(w1), resident(b1),
            resident(w2), resident(b2),
            resident(w3), resident(b3),
        ],
        out_specs=pl.BlockSpec((TR, 3 * P), lambda i: (i, 0)),
        compiler_params=pltpu.CompilerParams(
            dimension_semantics=("parallel",),             # megacore sharding on v7x
        ),
    )(x_p, w1, b1, w2, b2, w3, b3)

    return out_p.reshape(B, 3)                             # free row-major reshape


def init_params(key):
    """nn.Linear-style fan-in uniform init. Weights stored (in, out) so the kernel
    computes x @ W + b, equivalent to PyTorch's x @ W.T + b with W stored (out, in)."""
    k1, k2, k3, k4, k5, k6 = jax.random.split(key, 6)

    def uniform_init(k, shape, fan_in):
        bound = 1.0 / jnp.sqrt(fan_in)
        return jax.random.uniform(k, shape, jnp.float32, -bound, bound)

    return {
        "w1": uniform_init(k1, (63, 16), 63.0),
        "b1": uniform_init(k2, (1, 16), 63.0),
        "w2": uniform_init(k3, (16, 8), 16.0),
        "b2": uniform_init(k4, (1, 8), 16.0),
        "w3": uniform_init(k5, (8, 3), 8.0),
        "b3": uniform_init(k6, (1, 3), 8.0),
    }


def reference_forward(x_flat, params):
    h1 = jnp.maximum(x_flat @ params["w1"] + params["b1"], 0.0)
    h2 = jnp.maximum(h1 @ params["w2"] + params["b2"], 0.0)
    return h2 @ params["w3"] + params["b3"]


if __name__ == "__main__":
    key = jax.random.PRNGKey(0)
    kp, kx1, kx2, kx3, kx4 = jax.random.split(key, 5)
    params = init_params(kp)

    # Tolerance note: both kernel and reference use default-precision f32 matmuls;
    # the TPU may realize those with bf16 passes whose count can differ between
    # XLA and Mosaic, so we allow ~1e-2 (real logic bugs produce far larger errors).
    ATOL = RTOL = 1e-2

    # (B, 21, 3) landmark layout: exercises flatten + pack=4 + single-block grid.
    x_small = jax.random.normal(kx1, (8, 21, 3), jnp.float32)
    out_small = neural_network_forward(x_small, params)
    jax.block_until_ready(out_small)
    ref_small = reference_forward(x_small.reshape(8, -1), params)
    assert out_small.shape == (8, 3)
    assert jnp.allclose(out_small, ref_small, atol=ATOL, rtol=RTOL)

    # Ragged multi-step grid: B=1000 -> R=250 packed rows, TR=64, 4 grid steps.
    x_big = jax.random.normal(kx2, (1000, 63), jnp.float32)
    out_big = neural_network_forward(x_big, params)
    jax.block_until_ready(out_big)
    ref_big = reference_forward(x_big, params)
    assert out_big.shape == (1000, 3)
    assert jnp.allclose(out_big, ref_big, atol=ATOL, rtol=RTOL)

    # pack=2 path (B % 4 != 0) -- also the recommended setting for v5e.
    x_p2 = jax.random.normal(kx3, (10, 63), jnp.float32)
    out_p2 = neural_network_forward(x_p2, params)
    jax.block_until_ready(out_p2)
    assert out_p2.shape == (10, 3)
    assert jnp.allclose(out_p2, reference_forward(x_p2, params), atol=ATOL, rtol=RTOL)

    # pack=1 fallback (odd batch).
    x_p1 = jax.random.normal(kx4, (7, 63), jnp.float32)
    out_p1 = neural_network_forward(x_p1, params)
    jax.block_until_ready(out_p1)
    assert out_p1.shape == (7, 3)
    assert jnp.allclose(out_p1, reference_forward(x_p1, params), atol=ATOL, rtol=RTOL)

    print("KERNEL_OK")
</pallas_src>

<mosaic_0001>
module attributes {stable_mosaic.version = 11 : i64} {
  func.func @mlp_kernel(%arg0: i32, %arg1: memref<2x252xf32, #tpu.memory_space<vmem>>, %arg2: memref<252x64xf32, #tpu.memory_space<vmem>>, %arg3: memref<1x64xf32, #tpu.memory_space<vmem>>, %arg4: memref<64x32xf32, #tpu.memory_space<vmem>>, %arg5: memref<1x32xf32, #tpu.memory_space<vmem>>, %arg6: memref<32x12xf32, #tpu.memory_space<vmem>>, %arg7: memref<1x12xf32, #tpu.memory_space<vmem>>, %arg8: memref<2x12xf32, #tpu.memory_space<vmem>>) attributes {dimension_semantics = [#tpu.dimension_semantics<parallel>], iteration_bounds = array<i64: 1>, scalar_prefetch = 0 : i64, scratch_operands = 0 : i64, tpu.core_type = #tpu.core_type<tc>, window_params = [{transform_indices = @transform_0, window_bounds = array<i64: 2, 252>}, {pipeline_mode = #tpu.pipeline_mode<synchronous>, transform_indices = @transform_1, window_bounds = array<i64: 252, 64>}, {pipeline_mode = #tpu.pipeline_mode<synchronous>, transform_indices = @transform_2, window_bounds = array<i64: 1, 64>}, {pipeline_mode = #tpu.pipeline_mode<synchronous>, transform_indices = @transform_3, window_bounds = array<i64: 64, 32>}, {pipeline_mode = #tpu.pipeline_mode<synchronous>, transform_indices = @transform_4, window_bounds = array<i64: 1, 32>}, {pipeline_mode = #tpu.pipeline_mode<synchronous>, transform_indices = @transform_5, window_bounds = array<i64: 32, 12>}, {pipeline_mode = #tpu.pipeline_mode<synchronous>, transform_indices = @transform_6, window_bounds = array<i64: 1, 12>}, {transform_indices = @transform_7, window_bounds = array<i64: 2, 12>}]} {
    %c0 = arith.constant 0 : index
    %c0_0 = arith.constant 0 : index
    %0 = vector.load %arg1[%c0, %c0_0] : memref<2x252xf32, #tpu.memory_space<vmem>>, vector<2x252xf32>
    %c0_1 = arith.constant 0 : index
    %c0_2 = arith.constant 0 : index
    %1 = vector.load %arg2[%c0_1, %c0_2] : memref<252x64xf32, #tpu.memory_space<vmem>>, vector<252x64xf32>
    %cst = arith.constant dense<0.000000e+00> : vector<2x64xf32>
    %2 = tpu.matmul %0, %1, %cst {dimension_numbers = #tpu.dot_dimension_numbers<[1], [0], [0], [1], [0, 0, 1, 1], [], []>} : vector<2x252xf32>, vector<252x64xf32>, vector<2x64xf32> -> vector<2x64xf32>
    %c0_3 = arith.constant 0 : index
    %c0_4 = arith.constant 0 : index
    %3 = vector.load %arg3[%c0_3, %c0_4] : memref<1x64xf32, #tpu.memory_space<vmem>>, vector<1x64xf32>
    %4 = vector.broadcast %3 : vector<1x64xf32> to vector<2x64xf32>
    %5 = arith.addf %2, %4 : vector<2x64xf32>
    %cst_5 = arith.constant 0.000000e+00 : f32
    %6 = vector.broadcast %cst_5 : f32 to vector<2x64xf32>
    %7 = arith.maximumf %5, %6 : vector<2x64xf32>
    %c0_6 = arith.constant 0 : index
    %c0_7 = arith.constant 0 : index
    %8 = vector.load %arg4[%c0_6, %c0_7] : memref<64x32xf32, #tpu.memory_space<vmem>>, vector<64x32xf32>
    %cst_8 = arith.constant dense<0.000000e+00> : vector<2x32xf32>
    %9 = tpu.matmul %7, %8, %cst_8 {dimension_numbers = #tpu.dot_dimension_numbers<[1], [0], [0], [1], [0, 0, 1, 1], [], []>} : vector<2x64xf32>, vector<64x32xf32>, vector<2x32xf32> -> vector<2x32xf32>
    %c0_9 = arith.constant 0 : index
    %c0_10 = arith.constant 0 : index
    %10 = vector.load %arg5[%c0_9, %c0_10] : memref<1x32xf32, #tpu.memory_space<vmem>>, vector<1x32xf32>
    %11 = vector.broadcast %10 : vector<1x32xf32> to vector<2x32xf32>
    %12 = arith.addf %9, %11 : vector<2x32xf32>
    %cst_11 = arith.constant 0.000000e+00 : f32
    %13 = vector.broadcast %cst_11 : f32 to vector<2x32xf32>
    %14 = arith.maximumf %12, %13 : vector<2x32xf32>
    %c0_12 = arith.constant 0 : index
    %c0_13 = arith.constant 0 : index
    %15 = vector.load %arg6[%c0_12, %c0_13] : memref<32x12xf32, #tpu.memory_space<vmem>>, vector<32x12xf32>
    %cst_14 = arith.constant dense<0.000000e+00> : vector<2x12xf32>
    %16 = tpu.matmul %14, %15, %cst_14 {dimension_numbers = #tpu.dot_dimension_numbers<[1], [0], [0], [1], [0, 0, 1, 1], [], []>} : vector<2x32xf32>, vector<32x12xf32>, vector<2x12xf32> -> vector<2x12xf32>
    %c0_15 = arith.constant 0 : index
    %c0_16 = arith.constant 0 : index
    %17 = vector.load %arg7[%c0_15, %c0_16] : memref<1x12xf32, #tpu.memory_space<vmem>>, vector<1x12xf32>
    %18 = vector.broadcast %17 : vector<1x12xf32> to vector<2x12xf32>
    %19 = arith.addf %16, %18 : vector<2x12xf32>
    %c0_17 = arith.constant 0 : index
    %c0_18 = arith.constant 0 : index
    %20 = vector.load %arg8[%c0_17, %c0_18] : memref<2x12xf32, #tpu.memory_space<vmem>>, vector<2x12xf32>
    tpu.vector_store %arg8[%c0_17, %c0_18], %19 {strides = array<i32>} : memref<2x12xf32, #tpu.memory_space<vmem>>, vector<2x12xf32>,
    return
  }
  func.func @transform_0(%arg0: i32) -> (i32, i32) {
    %c0_i32 = arith.constant 0 : i32
    %c0_i32_0 = arith.constant 0 : i32
    return %arg0, %c0_i32 : i32, i32
  }
  func.func @transform_1(%arg0: i32) -> (i32, i32) {
    %c0_i32 = arith.constant 0 : i32
    %c0_i32_0 = arith.constant 0 : i32
    %c0_i32_1 = arith.constant 0 : i32
    return %c0_i32, %c0_i32_0 : i32, i32
  }
  func.func @transform_2(%arg0: i32) -> (i32, i32) {
    %c0_i32 = arith.constant 0 : i32
    %c0_i32_0 = arith.constant 0 : i32
    %c0_i32_1 = arith.constant 0 : i32
    return %c0_i32, %c0_i32_0 : i32, i32
  }
  func.func @transform_3(%arg0: i32) -> (i32, i32) {
    %c0_i32 = arith.constant 0 : i32
    %c0_i32_0 = arith.constant 0 : i32
    %c0_i32_1 = arith.constant 0 : i32
    return %c0_i32, %c0_i32_0 : i32, i32
  }
  func.func @transform_4(%arg0: i32) -> (i32, i32) {
    %c0_i32 = arith.constant 0 : i32
    %c0_i32_0 = arith.constant 0 : i32
    %c0_i32_1 = arith.constant 0 : i32
    return %c0_i32, %c0_i32_0 : i32, i32
  }
  func.func @transform_5(%arg0: i32) -> (i32, i32) {
    %c0_i32 = arith.constant 0 : i32
    %c0_i32_0 = arith.constant 0 : i32
    %c0_i32_1 = arith.constant 0 : i32
    return %c0_i32, %c0_i32_0 : i32, i32
  }
  func.func @transform_6(%arg0: i32) -> (i32, i32) {
    %c0_i32 = arith.constant 0 : i32
    %c0_i32_0 = arith.constant 0 : i32
    %c0_i32_1 = arith.constant 0 : i32
    return %c0_i32, %c0_i32_0 : i32, i32
  }
  func.func @transform_7(%arg0: i32) -> (i32, i32) {
    %c0_i32 = arith.constant 0 : i32
    %c0_i32_0 = arith.constant 0 : i32
    return %arg0, %c0_i32 : i32, i32
  }
}

</mosaic_0001>

<llo_original>
// kernel: tpu_custom_call.1
$region0: #{tpu_custom_call.1}
  #allocation0 [shape = 'u32[]', space=smem, size = 0x4, offset = 0x4, fixed_abs, tag = 'smem constant byte address 0x4 - core index']
  #allocation1 [shape = 'u32[144,128]{1,0:T(1,128)}', space=vmem, size = 0x12000, scoped, tag = 'internal scratch']
  %s0 = inlined_call_operand.vmem [shape: f32[2,252], index: 0, kind: input, shape index: {}]
  %s1 = inlined_call_operand.vmem [shape: f32[252,64], index: 1, kind: input, shape index: {}]
  %s2 = inlined_call_operand.vmem [shape: f32[1,64], index: 2, kind: input, shape index: {}]
  %s3 = inlined_call_operand.vmem [shape: f32[64,32], index: 3, kind: input, shape index: {}]
  %s4 = inlined_call_operand.vmem [shape: f32[1,32], index: 4, kind: input, shape index: {}]
  %s5 = inlined_call_operand.vmem [shape: f32[32,12], index: 5, kind: input, shape index: {}]
  %s6 = inlined_call_operand.vmem [shape: f32[1,12], index: 6, kind: input, shape index: {}]
  %s7 = inlined_call_operand.hbm [shape: f32[2,12], index: 7, kind: output, shape index: {}]
  %s8 = sld [smem:[#allocation0]]
  $region38: #{tpu_custom_call.1} parent=0
    _
  %s10 = ssub.s32 1, %s8
  %s11 = scalar_select 0, %s10, %s8
  $region1: #{tpu_custom_call.1} parent=0
    #allocation2 [shape = 'u8[1024]{0}', space=vmem, size = 0x400, scoped, tag = 'output window, operand 0, single buffered']
    #allocation3 [shape = 's32[1]{0}', space=sflag, size = 0x4, scoped, tag = 'scoped memory for tpu_custom_call.1']
    %12 = vsyncpa [#allocation3], 0
    // Predicated region
    $region2: #{tpu_custom_call.1} parent=1 // pred_check
      _
    $region3: #{tpu_custom_call.1} parent=1 // pred_check_branch
      %14 = sbr.rel (0) target = $region5
    $region4: #{tpu_custom_call.1} parent=1 // pred_region
      _
    $region5: #{tpu_custom_call.1} parent=1 // pred_fallthru
      _
    // Predicated region
    $region6: #{tpu_custom_call.1} parent=1 // pred_check
      _
    $region7: #{tpu_custom_call.1} parent=1 // pred_check_branch
      %16 = sbr.rel (0) target = $region9
    $region8: #{tpu_custom_call.1} parent=1 // pred_region
      _
    $region9: #{tpu_custom_call.1} parent=1 // pred_fallthru
      _
    // Predicated region
    $region10: #{tpu_custom_call.1} parent=1 // pred_check
      _
    $region11: #{tpu_custom_call.1} parent=1 // pred_check_branch
      %18 = sbr.rel (0) target = $region13
    $region12: #{tpu_custom_call.1} parent=1 // pred_region
      _
    $region13: #{tpu_custom_call.1} parent=1 // pred_fallthru
      _
    // Predicated region
    $region14: #{tpu_custom_call.1} parent=1 // pred_check
      _
    $region15: #{tpu_custom_call.1} parent=1 // pred_check_branch
      %20 = sbr.rel (0) target = $region17
    $region16: #{tpu_custom_call.1} parent=1 // pred_region
      _
    $region17: #{tpu_custom_call.1} parent=1 // pred_fallthru
      _
    // Predicated region
    $region18: #{tpu_custom_call.1} parent=1 // pred_check
      _
    $region19: #{tpu_custom_call.1} parent=1 // pred_check_branch
      %22 = sbr.rel (0) target = $region21
    $region20: #{tpu_custom_call.1} parent=1 // pred_region
      _
    $region21: #{tpu_custom_call.1} parent=1 // pred_fallthru
      _
    // Predicated region
    $region22: #{tpu_custom_call.1} parent=1 // pred_check
      _
    $region23: #{tpu_custom_call.1} parent=1 // pred_check_branch
      %24 = sbr.rel (0) target = $region25
    $region24: #{tpu_custom_call.1} parent=1 // pred_region
      _
    $region25: #{tpu_custom_call.1} parent=1 // pred_fallthru
      _
    // Predicated region
    $region26: #{tpu_custom_call.1} parent=1 // pred_check
      _
    $region27: #{tpu_custom_call.1} parent=1 // pred_check_branch
      %26 = sbr.rel (0) target = $region29
    $region28: #{tpu_custom_call.1} parent=1 // pred_region
      _
    $region29: #{tpu_custom_call.1} parent=1 // pred_fallthru
      _
    %v27 = vld [vmem:[%s0] sm:$0xf]
    %v28 = vld [vmem:[%s1] sm:$0xff]
    %v29 = vld [vmem:[%s1 + $0x8] sm:$0xff]
    %v30 = vld [vmem:[%s1 + $0x10] sm:$0xff]
    %v31 = vld [vmem:[%s1 + $0x18] sm:$0xff]
    %v32 = vld [vmem:[%s1 + $0x20] sm:$0xff]
    %v33 = vld [vmem:[%s1 + $0x28] sm:$0xff]
    %v34 = vld [vmem:[%s1 + $0x30] sm:$0xff]
    %v35 = vld [vmem:[%s1 + $0x38] sm:$0xff]
    %v36 = vld [vmem:[%s1 + $0x40] sm:$0xff]
    %v37 = vld [vmem:[%s1 + $0x48] sm:$0xff]
    %v38 = vld [vmem:[%s1 + $0x50] sm:$0xff]
    %v39 = vld [vmem:[%s1 + $0x58] sm:$0xff]
    %v40 = vld [vmem:[%s1 + $0x60] sm:$0xff]
    %v41 = vld [vmem:[%s1 + $0x68] sm:$0xff]
    %v42 = vld [vmem:[%s1 + $0x70] sm:$0xff]
    %v43 = vld [vmem:[%s1 + $0x78] sm:$0xff]
    %v44 = vld [vmem:[%s1 + $0x80] sm:$0xff]
    %v45 = vld [vmem:[%s1 + $0x88] sm:$0xff]
    %v46 = vld [vmem:[%s1 + $0x90] sm:$0xff]
    %v47 = vld [vmem:[%s1 + $0x98] sm:$0xff]
    %v48 = vld [vmem:[%s1 + $0xa0] sm:$0xff]
    %v49 = vld [vmem:[%s1 + $0xa8] sm:$0xff]
    %v50 = vld [vmem:[%s1 + $0xb0] sm:$0xff]
    %v51 = vld [vmem:[%s1 + $0xb8] sm:$0xff]
    %v52 = vld [vmem:[%s1 + $0xc0] sm:$0xff]
    %v53 = vld [vmem:[%s1 + $0xc8] sm:$0xff]
    %v54 = vld [vmem:[%s1 + $0xd0] sm:$0xff]
    %v55 = vld [vmem:[%s1 + $0xd8] sm:$0xff]
    %v56 = vld [vmem:[%s1 + $0xe0] sm:$0xff]
    %v57 = vld [vmem:[%s1 + $0xe8] sm:$0xff]
    %v58 = vld [vmem:[%s1 + $0xf0] sm:$0xff]
    %v59 = vld [vmem:[%s1 + $0xf8] sm:$0xf]
    %v60 = vld [vmem:[%s2] sm:$0x1]
    %v62 = vlaneseq
    %v63 = vshrl.u32 %v62, 7
    %v64 = vsub.s32 0, %v63
    %v65 = vrot.slane %v60, %v64
    %v69 = vunpack.c.l.s4 1983009808
    %v70 = vunpack.c.0.s8 %v69
    %v71 = vlaneseq
    %v72 = vshrl.u32 %v71, 7
    %v73 = vsub.s32 %v70, %v72
    %v74 = vrot.slane %v27, %v73
    %v75 = vcombine.high %v74, %v74
    %vm77 = vcmask 1014784
    %v78 = vsel %vm77, %v75, 0
    %vm80 = vcmask 1043456
    %v82 = vsel %vm80, %v59, 0
    %84 = vmatprep.subr.mxu0 0.0
    %85 = vmatpush1.msra.mxu0 %v28
    %86 = vmatprep.subr.mxu0 0.0
    %87 = vmatpush1.msra.mxu0 %v29
    %88 = vmatprep.subr.mxu0 0.0
    %89 = vmatpush1.msra.mxu0 %v30
    %90 = vmatprep.subr.mxu0 0.0
    %91 = vmatpush1.msra.mxu0 %v31
    %92 = vmatprep.subr.mxu0 0.0
    %93 = vmatpush1.msra.mxu0 %v32
    %94 = vmatprep.subr.mxu0 0.0
    %95 = vmatpush1.msra.mxu0 %v33
    %96 = vmatprep.subr.mxu0 0.0
    %97 = vmatpush1.msra.mxu0 %v34
    %98 = vmatprep.subr.mxu0 0.0
    %99 = vmatpush1.msra.mxu0 %v35
    %100 = vmatprep.subr.mxu0 0.0
    %101 = vmatpush1.msra.mxu0 %v36
    %102 = vmatprep.subr.mxu0 0.0
    %103 = vmatpush1.msra.mxu0 %v37
    %104 = vmatprep.subr.mxu0 0.0
    %105 = vmatpush1.msra.mxu0 %v38
    %106 = vmatprep.subr.mxu0 0.0
    %107 = vmatpush1.msra.mxu0 %v39
    %108 = vmatprep.subr.mxu0 0.0
    %109 = vmatpush1.msra.mxu0 %v40
    %110 = vmatprep.subr.mxu0 0.0
    %111 = vmatpush1.msra.mxu0 %v41
    %112 = vmatprep.subr.mxu0 0.0
    %113 = vmatpush1.msra.mxu0 %v42
    %114 = vmatprep.subr.mxu0 0.0
    %115 = vmatpush1.msra.mxu0 %v43
    %116 = vmatprep.subr.mxu0 0.0
    %117 = vmatpush1.msra.mxu0 %v44
    %118 = vmatprep.subr.mxu0 0.0
    %119 = vmatpush1.msra.mxu0 %v45
    %120 = vmatprep.subr.mxu0 0.0
    %121 = vmatpush1.msra.mxu0 %v46
    %122 = vmatprep.subr.mxu0 0.0
    %123 = vmatpush1.msra.mxu0 %v47
    %124 = vmatprep.subr.mxu0 0.0
    %125 = vmatpush1.msra.mxu0 %v48
    %126 = vmatprep.subr.mxu0 0.0
    %127 = vmatpush1.msra.mxu0 %v49
    %128 = vmatprep.subr.mxu0 0.0
    %129 = vmatpush1.msra.mxu0 %v50
    %130 = vmatprep.subr.mxu0 0.0
    %131 = vmatpush1.msra.mxu0 %v51
    %132 = vmatprep.subr.mxu0 0.0
    %133 = vmatpush1.msra.mxu0 %v52
    %134 = vmatprep.subr.mxu0 0.0
    %135 = vmatpush1.msra.mxu0 %v53
    %136 = vmatprep.subr.mxu0 0.0
    %137 = vmatpush1.msra.mxu0 %v54
    %138 = vmatprep.subr.mxu0 0.0
    %139 = vmatpush1.msra.mxu0 %v55
    %140 = vmatprep.subr.mxu0 0.0
    %141 = vmatpush1.msra.mxu0 %v56
    %142 = vmatprep.subr.mxu0 0.0
    %143 = vmatpush1.msra.mxu0 %v57
    %144 = vmatprep.subr.mxu0 0.0
    %145 = vmatpush1.msra.mxu0 %v58
    %146 = vmatprep.subr.mxu0 0.0
    %147 = vmatpush1.msra.mxu0 %v82
    %148 = vmatprep.mubr.f32.mxu0 %v78
    %149 = vmatmul.mubr.f32.gmra.mrb[0].mxu0 %v74
    %v150 = vpop.f32.mrb[0].mxu0
    %v151 = vadd.f32 %v65, %v150
    %v152 = vpop.f32.mrb[0].mxu0
    %153 = vdwg.mxu0
    %v154 = vmax.f32 %v151, 0.0
    %v155 = vld [vmem:[%s3] sm:$0xff]
    %v156 = vld [vmem:[%s3 + $0x8] sm:$0xff]
    %v157 = vld [vmem:[%s3 + $0x10] sm:$0xff]
    %v158 = vld [vmem:[%s3 + $0x18] sm:$0xff]
    %v159 = vld [vmem:[%s3 + $0x20] sm:$0xff]
    %v160 = vld [vmem:[%s3 + $0x28] sm:$0xff]
    %v161 = vld [vmem:[%s3 + $0x30] sm:$0xff]
    %v162 = vld [vmem:[%s3 + $0x38] sm:$0xff]
    %v163 = vld [vmem:[%s4] sm:$0x1]
    %v165 = vlaneseq
    %v166 = vshrl.u32 %v165, 7
    %v167 = vsub.s32 0, %v166
    %v168 = vrot.slane %v163, %v167
    %vm170 = vcmask 523264
    %v172 = vsel %vm170, %v154, 0
    %174 = vmatprep.subr.mxu0 0.0
    %175 = vmatpush1.msra.mxu0 %v155
    %176 = vmatprep.subr.mxu0 0.0
    %177 = vmatpush1.msra.mxu0 %v156
    %178 = vmatprep.subr.mxu0 0.0
    %179 = vmatpush1.msra.mxu0 %v157
    %180 = vmatprep.subr.mxu0 0.0
    %181 = vmatpush1.msra.mxu0 %v158
    %182 = vmatprep.subr.mxu0 0.0
    %183 = vmatpush1.msra.mxu0 %v159
    %184 = vmatprep.subr.mxu0 0.0
    %185 = vmatpush1.msra.mxu0 %v160
    %186 = vmatprep.subr.mxu0 0.0
    %187 = vmatpush1.msra.mxu0 %v161
    %188 = vmatprep.subr.mxu0 0.0
    %189 = vmatpush1.msra.mxu0 %v162
    %190 = vmatprep.subr.mxu0 0.0
    %191 = vmatpush1.msra.mxu0 0.0
    %192 = vmatprep.subr.mxu0 0.0
    %193 = vmatpush1.msra.mxu0 0.0
    %194 = vmatprep.subr.mxu0 0.0
    %195 = vmatpush1.msra.mxu0 0.0
    %196 = vmatprep.subr.mxu0 0.0
    %197 = vmatpush1.msra.mxu0 0.0
    %198 = vmatprep.subr.mxu0 0.0
    %199 = vmatpush1.msra.mxu0 0.0
    %200 = vmatprep.subr.mxu0 0.0
    %201 = vmatpush1.msra.mxu0 0.0
    %202 = vmatprep.subr.mxu0 0.0
    %203 = vmatpush1.msra.mxu0 0.0
    %204 = vmatprep.subr.mxu0 0.0
    %205 = vmatpush1.msra.mxu0 0.0
    %206 = vmatprep.subr.mxu0 0.0
    %207 = vmatpush1.msra.mxu0 0.0
    %208 = vmatprep.subr.mxu0 0.0
    %209 = vmatpush1.msra.mxu0 0.0
    %210 = vmatprep.subr.mxu0 0.0
    %211 = vmatpush1.msra.mxu0 0.0
    %212 = vmatprep.subr.mxu0 0.0
    %213 = vmatpush1.msra.mxu0 0.0
    %214 = vmatprep.subr.mxu0 0.0
    %215 = vmatpush1.msra.mxu0 0.0
    %216 = vmatprep.subr.mxu0 0.0
    %217 = vmatpush1.msra.mxu0 0.0
    %218 = vmatprep.subr.mxu0 0.0
    %219 = vmatpush1.msra.mxu0 0.0
    %220 = vmatprep.subr.mxu0 0.0
    %221 = vmatpush1.msra.mxu0 0.0
    %222 = vmatprep.subr.mxu0 0.0
    %223 = vmatpush1.msra.mxu0 0.0
    %224 = vmatprep.subr.mxu0 0.0
    %225 = vmatpush1.msra.mxu0 0.0
    %226 = vmatprep.subr.mxu0 0.0
    %227 = vmatpush1.msra.mxu0 0.0
    %228 = vmatprep.subr.mxu0 0.0
    %229 = vmatpush1.msra.mxu0 0.0
    %230 = vmatprep.subr.mxu0 0.0
    %231 = vmatpush1.msra.mxu0 0.0
    %232 = vmatprep.subr.mxu0 0.0
    %233 = vmatpush1.msra.mxu0 0.0
    %234 = vmatprep.subr.mxu0 0.0
    %235 = vmatpush1.msra.mxu0 0.0
    %236 = vmatprep.subr.mxu0 0.0
    %237 = vmatpush1.msra.mxu0 0.0
    %238 = vmatprep.mubr.f32.mxu0 0.0
    %239 = vmatmul.mubr.f32.gmra.mrb[0].mxu0 %v172
    %v240 = vpop.f32.mrb[0].mxu0
    %v241 = vadd.f32 %v168, %v240
    %v242 = vpop.f32.mrb[0].mxu0
    %243 = vdwg.mxu0
    %v244 = vmax.f32 %v241, 0.0
    %v245 = vld [vmem:[%s5] sm:$0xff]
    %v246 = vld [vmem:[%s5 + $0x8] sm:$0xff]
    %v247 = vld [vmem:[%s5 + $0x10] sm:$0xff]
    %v248 = vld [vmem:[%s5 + $0x18] sm:$0xff]
    %v249 = vld [vmem:[%s6] sm:$0x1]
    %v251 = vlaneseq
    %v252 = vshrl.u32 %v251, 7
    %v253 = vsub.s32 0, %v252
    %v254 = vrot.slane %v249, %v253
    %vm256 = vcmask 261120
    %v258 = vsel %vm256, %v244, 0
    %260 = vmatprep.subr.mxu0 0.0
    %261 = vmatpush1.msra.mxu0 %v245
    %262 = vmatprep.subr.mxu0 0.0
    %263 = vmatpush1.msra.mxu0 %v246
    %264 = vmatprep.subr.mxu0 0.0
    %265 = vmatpush1.msra.mxu0 %v247
    %266 = vmatprep.subr.mxu0 0.0
    %267 = vmatpush1.msra.mxu0 %v248
    %268 = vmatprep.subr.mxu0 0.0
    %269 = vmatpush1.msra.mxu0 0.0
    %270 = vmatprep.subr.mxu0 0.0
    %271 = vmatpush1.msra.mxu0 0.0
    %272 = vmatprep.subr.mxu0 0.0
    %273 = vmatpush1.msra.mxu0 0.0
    %274 = vmatprep.subr.mxu0 0.0
    %275 = vmatpush1.msra.mxu0 0.0
    %276 = vmatprep.subr.mxu0 0.0
    %277 = vmatpush1.msra.mxu0 0.0
    %278 = vmatprep.subr.mxu0 0.0
    %279 = vmatpush1.msra.mxu0 0.0
    %280 = vmatprep.subr.mxu0 0.0
    %281 = vmatpush1.msra.mxu0 0.0
    %282 = vmatprep.subr.mxu0 0.0
    %283 = vmatpush1.msra.mxu0 0.0
    %284 = vmatprep.subr.mxu0 0.0
    %285 = vmatpush1.msra.mxu0 0.0
    %286 = vmatprep.subr.mxu0 0.0
    %287 = vmatpush1.msra.mxu0 0.0
    %288 = vmatprep.subr.mxu0 0.0
    %289 = vmatpush1.msra.mxu0 0.0
    %290 = vmatprep.subr.mxu0 0.0
    %291 = vmatpush1.msra.mxu0 0.0
    %292 = vmatprep.subr.mxu0 0.0
    %293 = vmatpush1.msra.mxu0 0.0
    %294 = vmatprep.subr.mxu0 0.0
    %295 = vmatpush1.msra.mxu0 0.0
    %296 = vmatprep.subr.mxu0 0.0
    %297 = vmatpush1.msra.mxu0 0.0
    %298 = vmatprep.subr.mxu0 0.0
    %299 = vmatpush1.msra.mxu0 0.0
    %300 = vmatprep.subr.mxu0 0.0
    %301 = vmatpush1.msra.mxu0 0.0
    %302 = vmatprep.subr.mxu0 0.0
    %303 = vmatpush1.msra.mxu0 0.0
    %304 = vmatprep.subr.mxu0 0.0
    %305 = vmatpush1.msra.mxu0 0.0
    %306 = vmatprep.subr.mxu0 0.0
    %307 = vmatpush1.msra.mxu0 0.0
    %308 = vmatprep.subr.mxu0 0.0
    %309 = vmatpush1.msra.mxu0 0.0
    %310 = vmatprep.subr.mxu0 0.0
    %311 = vmatpush1.msra.mxu0 0.0
    %312 = vmatprep.subr.mxu0 0.0
    %313 = vmatpush1.msra.mxu0 0.0
    %314 = vmatprep.subr.mxu0 0.0
    %315 = vmatpush1.msra.mxu0 0.0
    %316 = vmatprep.subr.mxu0 0.0
    %317 = vmatpush1.msra.mxu0 0.0
    %318 = vmatprep.subr.mxu0 0.0
    %319 = vmatpush1.msra.mxu0 0.0
    %320 = vmatprep.subr.mxu0 0.0
    %321 = vmatpush1.msra.mxu0 0.0
    %322 = vmatprep.subr.mxu0 0.0
    %323 = vmatpush1.msra.mxu0 0.0
    %324 = vmatprep.mubr.f32.mxu0 0.0
    %325 = vmatmul.mubr.f32.gmra.mrb[0].mxu0 %v258
    %v326 = vpop.f32.mrb[0].mxu0
    %v327 = vadd.f32 %v254, %v326
    %v328 = vpop.f32.mrb[0].mxu0
    %329 = vdwg.mxu0
    %vm330 = vcmask 91136
    %331 = vst.msk [vmem:[#allocation2] sm:$0x3] %vm330, %v327
    // Predicated region
    $region30: #{tpu_custom_call.1} parent=1 // pred_check
      _
    $region31: #{tpu_custom_call.1} parent=1 // pred_check_branch
      %333 = sbr.rel (0) target = $region33
    $region32: #{tpu_custom_call.1} parent=1 // pred_region
      %s335 = ssub.s32 32, 32
      %336 = vsyncadd [#allocation3], %s335
      %s338 = sshll.u32 [#allocation2], 4
      %s339 = int_to_ptr.vmem [resolvable:$true] %s338
      %341 = dma.vmem_to_hbm [thread:$0]  %s339, 32, %s7, [#allocation3]
    $region33: #{tpu_custom_call.1} parent=1 // pred_fallthru
      _
    // Predicated region
    $region34: #{tpu_custom_call.1} parent=1 // pred_check
      _
    $region35: #{tpu_custom_call.1} parent=1 // pred_check_branch
      %343 = sbr.rel (0) target = $region37
    $region36: #{tpu_custom_call.1} parent=1 // pred_region
      %344 = dma.done [#allocation3], 32
    $region37: #{tpu_custom_call.1} parent=1 // pred_fallthru
      _
    %345 = vsyncpa [#allocation3], 1

</llo_original>
